<compile_context>
chip_gen: v7x
topology: tpu7x:2x2x1
jax: 0.10.0
libtpu: 0.0.40
codegen_flags: <defaults>
</compile_context>

<pallas_src>
import functools

import jax
import jax.numpy as jnp
import numpy as np
from jax.experimental import pallas as pl
from jax.experimental.pallas import tpu as pltpu

EPS = 1e-5  # PyTorch InstanceNorm2d default (affine=False, no running stats)


def residual_block_kernel(x_ref, w1_ref, w2_ref, o_ref, col_ref, *, C, H, W):
    HW = H * W
    x = x_ref[...].astype(jnp.float32)  # (C, HW), spatial flattened into lanes

    # Lane-position masks for the reflection-pad edge fix-ups.
    pos = jax.lax.broadcasted_iota(jnp.int32, (1, HW), 1)
    colm = pos % W
    first_col = colm == 0            # w == 0
    last_col = colm == W - 1         # w == W-1
    first_row = pos < W              # h == 0
    last_row = pos >= HW - W         # h == H-1

    def conv3x3(y, w_ref):
        # y: (C, HW) f32. Build a bf16 im2col operand (9*C, HW) in VMEM
        # scratch, then one bf16 MXU matmul with f32 accumulation.
        # Column (+-1) shifts with reflection at w edges (XLU lane rolls; the
        # wrap-around positions are exactly the ones the masks overwrite).
        r_m1 = pltpu.roll(y, HW - 1, axis=1)   # [p] = y[p + 1]
        r_p1 = pltpu.roll(y, 1, axis=1)        # [p] = y[p - 1]
        xc = (
            jnp.where(first_col, r_m1, r_p1),  # dw = -1 (reflect w=0 -> w=1)
            y,                                 # dw =  0
            jnp.where(last_col, r_p1, r_m1),   # dw = +1 (reflect w=W-1 -> W-2)
        )
        # Row (+-1) shifts with reflection at h edges, written tap-by-tap into
        # the im2col scratch: tap t = kh*3 + kw occupies rows [t*C, (t+1)*C).
        # All shift/select math is f32; only the stores are bf16 (half the
        # vst count and half the scratch footprint vs. f32).
        for dw in range(3):
            yc = xc[dw]
            up = pltpu.roll(yc, W, axis=1)        # [p] = yc[p - W]
            dn = pltpu.roll(yc, HW - W, axis=1)   # [p] = yc[p + W]
            col_ref[(0 * 3 + dw) * C:(0 * 3 + dw + 1) * C, :] = (
                jnp.where(first_row, dn, up).astype(jnp.bfloat16))  # dh = -1
            col_ref[(1 * 3 + dw) * C:(1 * 3 + dw + 1) * C, :] = (
                yc.astype(jnp.bfloat16))                            # dh =  0
            col_ref[(2 * 3 + dw) * C:(2 * 3 + dw + 1) * C, :] = (
                jnp.where(last_row, up, dn).astype(jnp.bfloat16))   # dh = +1
        # Single MXU matmul: (C, 9C) bf16 @ (9C, HW) bf16 -> f32.  The Conv2d
        # bias is intentionally omitted: InstanceNorm2d(affine=False) cancels
        # any per-channel bias exactly.
        return jnp.dot(w_ref[...], col_ref[...],
                       preferred_element_type=jnp.float32)

    def instance_norm(y):
        # Fused per-channel sum / sum-of-squares (independent reductions),
        # biased variance, all in f32.
        m = jnp.mean(y, axis=-1, keepdims=True)
        m2 = jnp.mean(y * y, axis=-1, keepdims=True)
        v = m2 - m * m
        return (y - m) * jax.lax.rsqrt(v + EPS)

    h1 = jnp.maximum(instance_norm(conv3x3(x, w1_ref)), 0.0)
    h2 = instance_norm(conv3x3(h1, w2_ref))
    o_ref[...] = (x + h2).astype(o_ref.dtype)


def _vmem_limit_bytes(C, HW):
    f32, bf16 = 4, 2
    io = 2 * 2 * C * HW * f32          # x + out blocks, double-buffered, f32
    weights = 2 * 9 * C * C * bf16     # two packed bf16 weight mats (single-buffered)
    scratch = 9 * C * HW * bf16        # bf16 im2col scratch
    live = 8 * C * HW * f32            # f32 intermediates / regalloc headroom
    est = io + weights + scratch + live
    try:
        cap = int(pltpu.get_tpu_info().vmem_capacity_bytes)
    except Exception:  # pragma: no cover - conservative fallback
        cap = 128 * 2**20
    return int(max(min(est, int(cap * 0.9)), 16 * 2**20))


def residual_block(x, w1, b1, w2, b2):
    """x + IN(Conv3x3(ReLU(IN(Conv3x3(reflect_pad(x)))))), InstanceNorm affine=False.

    Conv biases b1/b2 are accepted for interface parity with nn.Conv2d but are
    unused: InstanceNorm2d(affine=False) cancels per-channel biases exactly.
    """
    del b1, b2
    N, C, H, W = x.shape
    HW = H * W

    # Pad channels to a multiple of 16 (bf16 sublane packing) so per-tap
    # im2col stores and MXU operands stay aligned.  Padded channels are zero
    # through the whole block (zero weights, no bias) and are sliced off.
    Cp = ((C + 15) // 16) * 16
    if Cp != C:
        x_in = jnp.pad(x, ((0, 0), (0, Cp - C), (0, 0), (0, 0)))
        w1 = jnp.pad(w1, ((0, Cp - C), (0, Cp - C), (0, 0), (0, 0)))
        w2 = jnp.pad(w2, ((0, Cp - C), (0, Cp - C), (0, 0), (0, 0)))
    else:
        x_in = x

    # Pack conv weights (Cout, Cin, 3, 3) -> (Cout, 9*Cin) in (kh, kw, cin)
    # order (matching the in-kernel im2col) and cast MXU operands to bf16.
    w1p = jnp.transpose(w1, (0, 2, 3, 1)).reshape(Cp, 9 * Cp).astype(jnp.bfloat16)
    w2p = jnp.transpose(w2, (0, 2, 3, 1)).reshape(Cp, 9 * Cp).astype(jnp.bfloat16)

    # Lane-dense I/O: flatten spatial into the last (lane) dimension.
    xf = x_in.reshape(N, Cp, HW)

    kernel = functools.partial(residual_block_kernel, C=Cp, H=H, W=W)
    out = pl.pallas_call(
        kernel,
        out_shape=jax.ShapeDtypeStruct((N, Cp, HW), x.dtype),
        grid_spec=pltpu.PrefetchScalarGridSpec(
            num_scalar_prefetch=0,
            grid=(N,),
            in_specs=[
                pl.BlockSpec((None, Cp, HW), lambda n: (n, 0, 0)),
                # Grid-invariant weights: single-buffered.
                pl.BlockSpec((Cp, 9 * Cp), lambda n: (0, 0),
                             pipeline_mode=pl.Buffered(1)),
                pl.BlockSpec((Cp, 9 * Cp), lambda n: (0, 0),
                             pipeline_mode=pl.Buffered(1)),
            ],
            out_specs=pl.BlockSpec((None, Cp, HW), lambda n: (n, 0, 0)),
            scratch_shapes=[pltpu.VMEM((9 * Cp, HW), jnp.bfloat16)],
        ),
        compiler_params=pltpu.CompilerParams(
            dimension_semantics=("parallel",),
            vmem_limit_bytes=_vmem_limit_bytes(Cp, HW),
        ),
    )(xf, w1p, w2p)
    out = out.reshape(N, Cp, H, W)
    return out[:, :C] if Cp != C else out


def reference(x, w1, b1, w2, b2, conv_dtype=jnp.float32):
    # Pure-JAX reference mirroring the PyTorch ResidualBlock (biases kept).
    # conv_dtype=bf16 reproduces the kernel's MXU-operand precision.
    def conv(y, w, b):
        yp = jnp.pad(y, ((0, 0), (0, 0), (1, 1), (1, 1)), mode="reflect")
        out = jax.lax.conv_general_dilated(
            yp.astype(conv_dtype), w.astype(conv_dtype),
            window_strides=(1, 1), padding="VALID",
            dimension_numbers=("NCHW", "OIHW", "NCHW"),
            preferred_element_type=jnp.float32)
        return out + b[None, :, None, None]

    def inorm(y):
        m = jnp.mean(y, axis=(2, 3), keepdims=True)
        v = jnp.mean((y - m) ** 2, axis=(2, 3), keepdims=True)
        return (y - m) * jax.lax.rsqrt(v + EPS)

    h = jnp.maximum(inorm(conv(x, w1, b1)), 0.0)
    h = inorm(conv(h, w2, b2))
    return x + h


if __name__ == "__main__":
    N, C, H, W = 2, 4, 16, 16

    key = jax.random.PRNGKey(0)
    kx, kw1, kb1, kw2, kb2 = jax.random.split(key, 5)

    x = jax.random.normal(kx, (N, C, H, W), dtype=jnp.float32)
    # Deterministic synthetic parameters (shapes from nn.Conv2d(C, C, 3)).
    w1 = jax.random.normal(kw1, (C, C, 3, 3), dtype=jnp.float32) * 0.2
    b1 = jax.random.normal(kb1, (C,), dtype=jnp.float32) * 0.1
    w2 = jax.random.normal(kw2, (C, C, 3, 3), dtype=jnp.float32) * 0.2
    b2 = jax.random.normal(kb2, (C,), dtype=jnp.float32) * 0.1

    out = jax.block_until_ready(residual_block(x, w1, b1, w2, b2))

    # Tight check against a reference with the kernel's numerics
    # (bf16 conv operands, f32 accumulation).
    ref_bf16 = jax.block_until_ready(
        reference(x, w1, b1, w2, b2, conv_dtype=jnp.bfloat16))
    np.testing.assert_allclose(np.asarray(out), np.asarray(ref_bf16),
                               rtol=5e-3, atol=5e-3)

    # Looser check against the full-f32 PyTorch-equivalent reference
    # (bf16 MXU operands bound the error at the percent level).
    ref_f32 = jax.block_until_ready(reference(x, w1, b1, w2, b2))
    np.testing.assert_allclose(np.asarray(out), np.asarray(ref_f32),
                               rtol=5e-2, atol=5e-2)

    print("KERNEL_OK")
</pallas_src>

<mosaic_0001>
module attributes {stable_mosaic.version = 11 : i64} {
  func.func @residual_block_kernel(%arg0: i32, %arg1: memref<1x16x256xf32, #tpu.memory_space<vmem>>, %arg2: memref<16x144xbf16, #tpu.memory_space<vmem>>, %arg3: memref<16x144xbf16, #tpu.memory_space<vmem>>, %arg4: memref<1x16x256xf32, #tpu.memory_space<vmem>>, %arg5: memref<144x256xbf16, #tpu.memory_space<vmem>>) attributes {dimension_semantics = [#tpu.dimension_semantics<parallel>], iteration_bounds = array<i64: 2>, scalar_prefetch = 0 : i64, scratch_operands = 1 : i64, tpu.core_type = #tpu.core_type<tc>, window_params = [{transform_indices = @transform_0, window_bounds = array<i64: 1, 16, 256>}, {pipeline_mode = #tpu.pipeline_mode<synchronous>, transform_indices = @transform_1, window_bounds = array<i64: 16, 144>}, {pipeline_mode = #tpu.pipeline_mode<synchronous>, transform_indices = @transform_2, window_bounds = array<i64: 16, 144>}, {transform_indices = @transform_3, window_bounds = array<i64: 1, 16, 256>}]} {
    %c0 = arith.constant 0 : index
    %c0_0 = arith.constant 0 : index
    %c0_1 = arith.constant 0 : index
    %0 = vector.load %arg1[%c0, %c0_0, %c0_1] : memref<1x16x256xf32, #tpu.memory_space<vmem>>, vector<1x16x256xf32>
    %1 = vector.shape_cast %0 : vector<1x16x256xf32> to vector<16x256xf32>
    %2 = tpu.iota {dimensions = array<i32: 1>} : vector<1x256xi32>
    %c16_i32 = arith.constant 16 : i32
    %c0_i32 = arith.constant 0 : i32
    %3 = arith.cmpi eq, %c16_i32, %c0_i32 : i32
    %c1_i32 = arith.constant 1 : i32
    %4 = arith.select %3, %c1_i32, %c16_i32 : i32
    %5 = vector.broadcast %4 : i32 to vector<1x256xi32>
    %6 = arith.remsi %2, %5 : vector<1x256xi32>
    %c0_i32_2 = arith.constant 0 : i32
    %7 = vector.broadcast %c0_i32_2 : i32 to vector<1x256xi32>
    %8 = arith.cmpi ne, %6, %7 : vector<1x256xi32>
    %c0_i32_3 = arith.constant 0 : i32
    %9 = vector.broadcast %c0_i32_3 : i32 to vector<1x256xi32>
    %10 = arith.cmpi slt, %6, %9 : vector<1x256xi32>
    %c0_i32_4 = arith.constant 0 : i32
    %11 = arith.cmpi slt, %4, %c0_i32_4 : i32
    %12 = vector.broadcast %11 : i1 to vector<1x256xi1>
    %13 = vector.broadcast %12 : vector<1x256xi1> to vector<1x256xi1>
    %14 = arith.xori %10, %13 : vector<1x256xi1>
    %15 = arith.andi %14, %8 : vector<1x256xi1>
    %16 = vector.broadcast %4 : i32 to vector<1x256xi32>
    %17 = arith.addi %6, %16 : vector<1x256xi32>
    %18 = arith.select %15, %17, %6 : vector<1x256xi1>, vector<1x256xi32>
    %c0_i32_5 = arith.constant 0 : i32
    %19 = vector.broadcast %c0_i32_5 : i32 to vector<1x256xi32>
    %20 = arith.cmpi eq, %18, %19 : vector<1x256xi32>
    %c15_i32 = arith.constant 15 : i32
    %21 = vector.broadcast %c15_i32 : i32 to vector<1x256xi32>
    %22 = arith.cmpi eq, %18, %21 : vector<1x256xi32>
    %c16_i32_6 = arith.constant 16 : i32
    %23 = vector.broadcast %c16_i32_6 : i32 to vector<1x256xi32>
    %24 = arith.cmpi slt, %2, %23 : vector<1x256xi32>
    %c240_i32 = arith.constant 240 : i32
    %25 = vector.broadcast %c240_i32 : i32 to vector<1x256xi32>
    %26 = arith.cmpi sge, %2, %25 : vector<1x256xi32>
    %c255_i32 = arith.constant 255 : i32
    %27 = tpu.dynamic_rotate %1 by %c255_i32 dim 1 : vector<16x256xf32>, i32 -> vector<16x256xf32>
    %c1_i32_7 = arith.constant 1 : i32
    %28 = tpu.dynamic_rotate %1 by %c1_i32_7 dim 1 : vector<16x256xf32>, i32 -> vector<16x256xf32>
    %29 = vector.shape_cast %20 : vector<1x256xi1> to vector<1x256xi1>
    %30 = vector.broadcast %29 : vector<1x256xi1> to vector<16x256xi1>
    %31 = arith.select %30, %27, %28 : vector<16x256xi1>, vector<16x256xf32>
    %32 = vector.shape_cast %22 : vector<1x256xi1> to vector<1x256xi1>
    %33 = vector.broadcast %32 : vector<1x256xi1> to vector<16x256xi1>
    %34 = arith.select %33, %28, %27 : vector<16x256xi1>, vector<16x256xf32>
    %c16_i32_8 = arith.constant 16 : i32
    %35 = tpu.dynamic_rotate %31 by %c16_i32_8 dim 1 : vector<16x256xf32>, i32 -> vector<16x256xf32>
    %c240_i32_9 = arith.constant 240 : i32
    %36 = tpu.dynamic_rotate %31 by %c240_i32_9 dim 1 : vector<16x256xf32>, i32 -> vector<16x256xf32>
    %37 = vector.shape_cast %24 : vector<1x256xi1> to vector<1x256xi1>
    %38 = vector.broadcast %37 : vector<1x256xi1> to vector<16x256xi1>
    %39 = arith.select %38, %36, %35 : vector<16x256xi1>, vector<16x256xf32>
    %40 = arith.truncf %39 : vector<16x256xf32> to vector<16x256xbf16>
    %c0_10 = arith.constant 0 : index
    %c0_11 = arith.constant 0 : index
    %41 = vector.load %arg5[%c0_10, %c0_11] : memref<144x256xbf16, #tpu.memory_space<vmem>>, vector<16x256xbf16>
    tpu.vector_store %arg5[%c0_10, %c0_11], %40 {strides = array<i32>} : memref<144x256xbf16, #tpu.memory_space<vmem>>, vector<16x256xbf16>,
    %42 = arith.truncf %31 : vector<16x256xf32> to vector<16x256xbf16>
    %c48 = arith.constant 48 : index
    %c0_12 = arith.constant 0 : index
    %43 = vector.load %arg5[%c48, %c0_12] : memref<144x256xbf16, #tpu.memory_space<vmem>>, vector<16x256xbf16>
    tpu.vector_store %arg5[%c48, %c0_12], %42 {strides = array<i32>} : memref<144x256xbf16, #tpu.memory_space<vmem>>, vector<16x256xbf16>,
    %44 = vector.shape_cast %26 : vector<1x256xi1> to vector<1x256xi1>
    %45 = vector.broadcast %44 : vector<1x256xi1> to vector<16x256xi1>
    %46 = arith.select %45, %35, %36 : vector<16x256xi1>, vector<16x256xf32>
    %47 = arith.truncf %46 : vector<16x256xf32> to vector<16x256xbf16>
    %c96 = arith.constant 96 : index
    %c0_13 = arith.constant 0 : index
    %48 = vector.load %arg5[%c96, %c0_13] : memref<144x256xbf16, #tpu.memory_space<vmem>>, vector<16x256xbf16>
    tpu.vector_store %arg5[%c96, %c0_13], %47 {strides = array<i32>} : memref<144x256xbf16, #tpu.memory_space<vmem>>, vector<16x256xbf16>,
    %c16_i32_14 = arith.constant 16 : i32
    %49 = tpu.dynamic_rotate %1 by %c16_i32_14 dim 1 : vector<16x256xf32>, i32 -> vector<16x256xf32>
    %c240_i32_15 = arith.constant 240 : i32
    %50 = tpu.dynamic_rotate %1 by %c240_i32_15 dim 1 : vector<16x256xf32>, i32 -> vector<16x256xf32>
    %51 = vector.shape_cast %24 : vector<1x256xi1> to vector<1x256xi1>
    %52 = vector.broadcast %51 : vector<1x256xi1> to vector<16x256xi1>
    %53 = arith.select %52, %50, %49 : vector<16x256xi1>, vector<16x256xf32>
    %54 = arith.truncf %53 : vector<16x256xf32> to vector<16x256xbf16>
    %c16 = arith.constant 16 : index
    %c0_16 = arith.constant 0 : index
    %55 = vector.load %arg5[%c16, %c0_16] : memref<144x256xbf16, #tpu.memory_space<vmem>>, vector<16x256xbf16>
    tpu.vector_store %arg5[%c16, %c0_16], %54 {strides = array<i32>} : memref<144x256xbf16, #tpu.memory_space<vmem>>, vector<16x256xbf16>,
    %56 = arith.truncf %1 : vector<16x256xf32> to vector<16x256xbf16>
    %c64 = arith.constant 64 : index
    %c0_17 = arith.constant 0 : index
    %57 = vector.load %arg5[%c64, %c0_17] : memref<144x256xbf16, #tpu.memory_space<vmem>>, vector<16x256xbf16>
    tpu.vector_store %arg5[%c64, %c0_17], %56 {strides = array<i32>} : memref<144x256xbf16, #tpu.memory_space<vmem>>, vector<16x256xbf16>,
    %58 = vector.shape_cast %26 : vector<1x256xi1> to vector<1x256xi1>
    %59 = vector.broadcast %58 : vector<1x256xi1> to vector<16x256xi1>
    %60 = arith.select %59, %49, %50 : vector<16x256xi1>, vector<16x256xf32>
    %61 = arith.truncf %60 : vector<16x256xf32> to vector<16x256xbf16>
    %c112 = arith.constant 112 : index
    %c0_18 = arith.constant 0 : index
    %62 = vector.load %arg5[%c112, %c0_18] : memref<144x256xbf16, #tpu.memory_space<vmem>>, vector<16x256xbf16>
    tpu.vector_store %arg5[%c112, %c0_18], %61 {strides = array<i32>} : memref<144x256xbf16, #tpu.memory_space<vmem>>, vector<16x256xbf16>,
    %c16_i32_19 = arith.constant 16 : i32
    %63 = tpu.dynamic_rotate %34 by %c16_i32_19 dim 1 : vector<16x256xf32>, i32 -> vector<16x256xf32>
    %c240_i32_20 = arith.constant 240 : i32
    %64 = tpu.dynamic_rotate %34 by %c240_i32_20 dim 1 : vector<16x256xf32>, i32 -> vector<16x256xf32>
    %65 = vector.shape_cast %24 : vector<1x256xi1> to vector<1x256xi1>
    %66 = vector.broadcast %65 : vector<1x256xi1> to vector<16x256xi1>
    %67 = arith.select %66, %64, %63 : vector<16x256xi1>, vector<16x256xf32>
    %68 = arith.truncf %67 : vector<16x256xf32> to vector<16x256xbf16>
    %c32 = arith.constant 32 : index
    %c0_21 = arith.constant 0 : index
    %69 = vector.load %arg5[%c32, %c0_21] : memref<144x256xbf16, #tpu.memory_space<vmem>>, vector<16x256xbf16>
    tpu.vector_store %arg5[%c32, %c0_21], %68 {strides = array<i32>} : memref<144x256xbf16, #tpu.memory_space<vmem>>, vector<16x256xbf16>,
    %70 = arith.truncf %34 : vector<16x256xf32> to vector<16x256xbf16>
    %c80 = arith.constant 80 : index
    %c0_22 = arith.constant 0 : index
    %71 = vector.load %arg5[%c80, %c0_22] : memref<144x256xbf16, #tpu.memory_space<vmem>>, vector<16x256xbf16>
    tpu.vector_store %arg5[%c80, %c0_22], %70 {strides = array<i32>} : memref<144x256xbf16, #tpu.memory_space<vmem>>, vector<16x256xbf16>,
    %72 = vector.shape_cast %26 : vector<1x256xi1> to vector<1x256xi1>
    %73 = vector.broadcast %72 : vector<1x256xi1> to vector<16x256xi1>
    %74 = arith.select %73, %63, %64 : vector<16x256xi1>, vector<16x256xf32>
    %75 = arith.truncf %74 : vector<16x256xf32> to vector<16x256xbf16>
    %c128 = arith.constant 128 : index
    %c0_23 = arith.constant 0 : index
    %76 = vector.load %arg5[%c128, %c0_23] : memref<144x256xbf16, #tpu.memory_space<vmem>>, vector<16x256xbf16>
    tpu.vector_store %arg5[%c128, %c0_23], %75 {strides = array<i32>} : memref<144x256xbf16, #tpu.memory_space<vmem>>, vector<16x256xbf16>,
    %c0_24 = arith.constant 0 : index
    %c0_25 = arith.constant 0 : index
    %77 = vector.load %arg2[%c0_24, %c0_25] : memref<16x144xbf16, #tpu.memory_space<vmem>>, vector<16x144xbf16>
    %c0_26 = arith.constant 0 : index
    %c0_27 = arith.constant 0 : index
    %78 = vector.load %arg5[%c0_26, %c0_27] : memref<144x256xbf16, #tpu.memory_space<vmem>>, vector<144x256xbf16>
    %cst = arith.constant dense<0.000000e+00> : vector<16x256xf32>
    %79 = tpu.matmul %77, %78, %cst {dimension_numbers = #tpu.dot_dimension_numbers<[1], [0], [0], [1], [0, 0, 1, 1], [], []>} : vector<16x144xbf16>, vector<144x256xbf16>, vector<16x256xf32> -> vector<16x256xf32>
    %cst_28 = arith.constant dense<0.000000e+00> : vector<16xf32>
    %80 = vector.multi_reduction <add>, %79, %cst_28 [1] : vector<16x256xf32> to vector<16xf32>
    %81 = vector.shape_cast %80 : vector<16xf32> to vector<16x1xf32>
    %cst_29 = arith.constant 2.560000e+02 : f32
    %82 = vector.broadcast %cst_29 : f32 to vector<16x1xf32>
    %83 = arith.divf %81, %82 : vector<16x1xf32>
    %84 = arith.mulf %79, %79 : vector<16x256xf32>
    %cst_30 = arith.constant dense<0.000000e+00> : vector<16xf32>
    %85 = vector.multi_reduction <add>, %84, %cst_30 [1] : vector<16x256xf32> to vector<16xf32>
    %86 = vector.shape_cast %85 : vector<16xf32> to vector<16x1xf32>
    %cst_31 = arith.constant 2.560000e+02 : f32
    %87 = vector.broadcast %cst_31 : f32 to vector<16x1xf32>
    %88 = arith.divf %86, %87 : vector<16x1xf32>
    %89 = arith.mulf %83, %83 : vector<16x1xf32>
    %90 = arith.subf %88, %89 : vector<16x1xf32>
    %91 = vector.broadcast %83 : vector<16x1xf32> to vector<16x256xf32>
    %92 = arith.subf %79, %91 : vector<16x256xf32>
    %cst_32 = arith.constant 9.99999974E-6 : f32
    %93 = vector.broadcast %cst_32 : f32 to vector<16x1xf32>
    %94 = arith.addf %90, %93 : vector<16x1xf32>
    %95 = math.rsqrt %94 : vector<16x1xf32>
    %96 = vector.broadcast %95 : vector<16x1xf32> to vector<16x256xf32>
    %97 = arith.mulf %92, %96 : vector<16x256xf32>
    %cst_33 = arith.constant 0.000000e+00 : f32
    %98 = vector.broadcast %cst_33 : f32 to vector<16x256xf32>
    %99 = arith.maximumf %97, %98 : vector<16x256xf32>
    %c255_i32_34 = arith.constant 255 : i32
    %100 = tpu.dynamic_rotate %99 by %c255_i32_34 dim 1 : vector<16x256xf32>, i32 -> vector<16x256xf32>
    %c1_i32_35 = arith.constant 1 : i32
    %101 = tpu.dynamic_rotate %99 by %c1_i32_35 dim 1 : vector<16x256xf32>, i32 -> vector<16x256xf32>
    %102 = vector.shape_cast %20 : vector<1x256xi1> to vector<1x256xi1>
    %103 = vector.broadcast %102 : vector<1x256xi1> to vector<16x256xi1>
    %104 = arith.select %103, %100, %101 : vector<16x256xi1>, vector<16x256xf32>
    %105 = vector.shape_cast %22 : vector<1x256xi1> to vector<1x256xi1>
    %106 = vector.broadcast %105 : vector<1x256xi1> to vector<16x256xi1>
    %107 = arith.select %106, %101, %100 : vector<16x256xi1>, vector<16x256xf32>
    %c16_i32_36 = arith.constant 16 : i32
    %108 = tpu.dynamic_rotate %104 by %c16_i32_36 dim 1 : vector<16x256xf32>, i32 -> vector<16x256xf32>
    %c240_i32_37 = arith.constant 240 : i32
    %109 = tpu.dynamic_rotate %104 by %c240_i32_37 dim 1 : vector<16x256xf32>, i32 -> vector<16x256xf32>
    %110 = vector.shape_cast %24 : vector<1x256xi1> to vector<1x256xi1>
    %111 = vector.broadcast %110 : vector<1x256xi1> to vector<16x256xi1>
    %112 = arith.select %111, %109, %108 : vector<16x256xi1>, vector<16x256xf32>
    %113 = arith.truncf %112 : vector<16x256xf32> to vector<16x256xbf16>
    %c0_38 = arith.constant 0 : index
    %c0_39 = arith.constant 0 : index
    %114 = vector.load %arg5[%c0_38, %c0_39] : memref<144x256xbf16, #tpu.memory_space<vmem>>, vector<16x256xbf16>
    tpu.vector_store %arg5[%c0_38, %c0_39], %113 {strides = array<i32>} : memref<144x256xbf16, #tpu.memory_space<vmem>>, vector<16x256xbf16>,
    %115 = arith.truncf %104 : vector<16x256xf32> to vector<16x256xbf16>
    %c48_40 = arith.constant 48 : index
    %c0_41 = arith.constant 0 : index
    %116 = vector.load %arg5[%c48_40, %c0_41] : memref<144x256xbf16, #tpu.memory_space<vmem>>, vector<16x256xbf16>
    tpu.vector_store %arg5[%c48_40, %c0_41], %115 {strides = array<i32>} : memref<144x256xbf16, #tpu.memory_space<vmem>>, vector<16x256xbf16>,
    %117 = vector.shape_cast %26 : vector<1x256xi1> to vector<1x256xi1>
    %118 = vector.broadcast %117 : vector<1x256xi1> to vector<16x256xi1>
    %119 = arith.select %118, %108, %109 : vector<16x256xi1>, vector<16x256xf32>
    %120 = arith.truncf %119 : vector<16x256xf32> to vector<16x256xbf16>
    %c96_42 = arith.constant 96 : index
    %c0_43 = arith.constant 0 : index
    %121 = vector.load %arg5[%c96_42, %c0_43] : memref<144x256xbf16, #tpu.memory_space<vmem>>, vector<16x256xbf16>
    tpu.vector_store %arg5[%c96_42, %c0_43], %120 {strides = array<i32>} : memref<144x256xbf16, #tpu.memory_space<vmem>>, vector<16x256xbf16>,
    %c16_i32_44 = arith.constant 16 : i32
    %122 = tpu.dynamic_rotate %99 by %c16_i32_44 dim 1 : vector<16x256xf32>, i32 -> vector<16x256xf32>
    %c240_i32_45 = arith.constant 240 : i32
    %123 = tpu.dynamic_rotate %99 by %c240_i32_45 dim 1 : vector<16x256xf32>, i32 -> vector<16x256xf32>
    %124 = vector.shape_cast %24 : vector<1x256xi1> to vector<1x256xi1>
    %125 = vector.broadcast %124 : vector<1x256xi1> to vector<16x256xi1>
    %126 = arith.select %125, %123, %122 : vector<16x256xi1>, vector<16x256xf32>
    %127 = arith.truncf %126 : vector<16x256xf32> to vector<16x256xbf16>
    %c16_46 = arith.constant 16 : index
    %c0_47 = arith.constant 0 : index
    %128 = vector.load %arg5[%c16_46, %c0_47] : memref<144x256xbf16, #tpu.memory_space<vmem>>, vector<16x256xbf16>
    tpu.vector_store %arg5[%c16_46, %c0_47], %127 {strides = array<i32>} : memref<144x256xbf16, #tpu.memory_space<vmem>>, vector<16x256xbf16>,
    %129 = arith.truncf %99 : vector<16x256xf32> to vector<16x256xbf16>
    %c64_48 = arith.constant 64 : index
    %c0_49 = arith.constant 0 : index
    %130 = vector.load %arg5[%c64_48, %c0_49] : memref<144x256xbf16, #tpu.memory_space<vmem>>, vector<16x256xbf16>
    tpu.vector_store %arg5[%c64_48, %c0_49], %129 {strides = array<i32>} : memref<144x256xbf16, #tpu.memory_space<vmem>>, vector<16x256xbf16>,
    %131 = vector.shape_cast %26 : vector<1x256xi1> to vector<1x256xi1>
    %132 = vector.broadcast %131 : vector<1x256xi1> to vector<16x256xi1>
    %133 = arith.select %132, %122, %123 : vector<16x256xi1>, vector<16x256xf32>
    %134 = arith.truncf %133 : vector<16x256xf32> to vector<16x256xbf16>
    %c112_50 = arith.constant 112 : index
    %c0_51 = arith.constant 0 : index
    %135 = vector.load %arg5[%c112_50, %c0_51] : memref<144x256xbf16, #tpu.memory_space<vmem>>, vector<16x256xbf16>
    tpu.vector_store %arg5[%c112_50, %c0_51], %134 {strides = array<i32>} : memref<144x256xbf16, #tpu.memory_space<vmem>>, vector<16x256xbf16>,
    %c16_i32_52 = arith.constant 16 : i32
    %136 = tpu.dynamic_rotate %107 by %c16_i32_52 dim 1 : vector<16x256xf32>, i32 -> vector<16x256xf32>
    %c240_i32_53 = arith.constant 240 : i32
    %137 = tpu.dynamic_rotate %107 by %c240_i32_53 dim 1 : vector<16x256xf32>, i32 -> vector<16x256xf32>
    %138 = vector.shape_cast %24 : vector<1x256xi1> to vector<1x256xi1>
    %139 = vector.broadcast %138 : vector<1x256xi1> to vector<16x256xi1>
    %140 = arith.select %139, %137, %136 : vector<16x256xi1>, vector<16x256xf32>
    %141 = arith.truncf %140 : vector<16x256xf32> to vector<16x256xbf16>
    %c32_54 = arith.constant 32 : index
    %c0_55 = arith.constant 0 : index
    %142 = vector.load %arg5[%c32_54, %c0_55] : memref<144x256xbf16, #tpu.memory_space<vmem>>, vector<16x256xbf16>
    tpu.vector_store %arg5[%c32_54, %c0_55], %141 {strides = array<i32>} : memref<144x256xbf16, #tpu.memory_space<vmem>>, vector<16x256xbf16>,
    %143 = arith.truncf %107 : vector<16x256xf32> to vector<16x256xbf16>
    %c80_56 = arith.constant 80 : index
    %c0_57 = arith.constant 0 : index
    %144 = vector.load %arg5[%c80_56, %c0_57] : memref<144x256xbf16, #tpu.memory_space<vmem>>, vector<16x256xbf16>
    tpu.vector_store %arg5[%c80_56, %c0_57], %143 {strides = array<i32>} : memref<144x256xbf16, #tpu.memory_space<vmem>>, vector<16x256xbf16>,
    %145 = vector.shape_cast %26 : vector<1x256xi1> to vector<1x256xi1>
    %146 = vector.broadcast %145 : vector<1x256xi1> to vector<16x256xi1>
    %147 = arith.select %146, %136, %137 : vector<16x256xi1>, vector<16x256xf32>
    %148 = arith.truncf %147 : vector<16x256xf32> to vector<16x256xbf16>
    %c128_58 = arith.constant 128 : index
    %c0_59 = arith.constant 0 : index
    %149 = vector.load %arg5[%c128_58, %c0_59] : memref<144x256xbf16, #tpu.memory_space<vmem>>, vector<16x256xbf16>
    tpu.vector_store %arg5[%c128_58, %c0_59], %148 {strides = array<i32>} : memref<144x256xbf16, #tpu.memory_space<vmem>>, vector<16x256xbf16>,
    %c0_60 = arith.constant 0 : index
    %c0_61 = arith.constant 0 : index
    %150 = vector.load %arg3[%c0_60, %c0_61] : memref<16x144xbf16, #tpu.memory_space<vmem>>, vector<16x144xbf16>
    %c0_62 = arith.constant 0 : index
    %c0_63 = arith.constant 0 : index
    %151 = vector.load %arg5[%c0_62, %c0_63] : memref<144x256xbf16, #tpu.memory_space<vmem>>, vector<144x256xbf16>
    %cst_64 = arith.constant dense<0.000000e+00> : vector<16x256xf32>
    %152 = tpu.matmul %150, %151, %cst_64 {dimension_numbers = #tpu.dot_dimension_numbers<[1], [0], [0], [1], [0, 0, 1, 1], [], []>} : vector<16x144xbf16>, vector<144x256xbf16>, vector<16x256xf32> -> vector<16x256xf32>
    %cst_65 = arith.constant dense<0.000000e+00> : vector<16xf32>
    %153 = vector.multi_reduction <add>, %152, %cst_65 [1] : vector<16x256xf32> to vector<16xf32>
    %154 = vector.shape_cast %153 : vector<16xf32> to vector<16x1xf32>
    %cst_66 = arith.constant 2.560000e+02 : f32
    %155 = vector.broadcast %cst_66 : f32 to vector<16x1xf32>
    %156 = arith.divf %154, %155 : vector<16x1xf32>
    %157 = arith.mulf %152, %152 : vector<16x256xf32>
    %cst_67 = arith.constant dense<0.000000e+00> : vector<16xf32>
    %158 = vector.multi_reduction <add>, %157, %cst_67 [1] : vector<16x256xf32> to vector<16xf32>
    %159 = vector.shape_cast %158 : vector<16xf32> to vector<16x1xf32>
    %cst_68 = arith.constant 2.560000e+02 : f32
    %160 = vector.broadcast %cst_68 : f32 to vector<16x1xf32>
    %161 = arith.divf %159, %160 : vector<16x1xf32>
    %162 = arith.mulf %156, %156 : vector<16x1xf32>
    %163 = arith.subf %161, %162 : vector<16x1xf32>
    %164 = vector.broadcast %156 : vector<16x1xf32> to vector<16x256xf32>
    %165 = arith.subf %152, %164 : vector<16x256xf32>
    %cst_69 = arith.constant 9.99999974E-6 : f32
    %166 = vector.broadcast %cst_69 : f32 to vector<16x1xf32>
    %167 = arith.addf %163, %166 : vector<16x1xf32>
    %168 = math.rsqrt %167 : vector<16x1xf32>
    %169 = vector.broadcast %168 : vector<16x1xf32> to vector<16x256xf32>
    %170 = arith.mulf %165, %169 : vector<16x256xf32>
    %171 = arith.addf %1, %170 : vector<16x256xf32>
    %c0_70 = arith.constant 0 : index
    %c0_71 = arith.constant 0 : index
    %c0_72 = arith.constant 0 : index
    %172 = vector.load %arg4[%c0_70, %c0_71, %c0_72] : memref<1x16x256xf32, #tpu.memory_space<vmem>>, vector<1x16x256xf32>
    %173 = vector.shape_cast %172 : vector<1x16x256xf32> to vector<16x256xf32>
    %174 = vector.shape_cast %171 : vector<16x256xf32> to vector<1x16x256xf32>
    tpu.vector_store %arg4[%c0_70, %c0_71, %c0_72], %174 {strides = array<i32>} : memref<1x16x256xf32, #tpu.memory_space<vmem>>, vector<1x16x256xf32>,
    return
  }
  func.func @transform_0(%arg0: i32) -> (i32, i32, i32) {
    %c0_i32 = arith.constant 0 : i32
    %c0_i32_0 = arith.constant 0 : i32
    %c0_i32_1 = arith.constant 0 : i32
    return %arg0, %c0_i32, %c0_i32_0 : i32, i32, i32
  }
  func.func @transform_1(%arg0: i32) -> (i32, i32) {
    %c0_i32 = arith.constant 0 : i32
    %c0_i32_0 = arith.constant 0 : i32
    %c0_i32_1 = arith.constant 0 : i32
    return %c0_i32, %c0_i32_0 : i32, i32
  }
  func.func @transform_2(%arg0: i32) -> (i32, i32) {
    %c0_i32 = arith.constant 0 : i32
    %c0_i32_0 = arith.constant 0 : i32
    %c0_i32_1 = arith.constant 0 : i32
    return %c0_i32, %c0_i32_0 : i32, i32
  }
  func.func @transform_3(%arg0: i32) -> (i32, i32, i32) {
    %c0_i32 = arith.constant 0 : i32
    %c0_i32_0 = arith.constant 0 : i32
    %c0_i32_1 = arith.constant 0 : i32
    return %arg0, %c0_i32, %c0_i32_0 : i32, i32, i32
  }
}

</mosaic_0001>

<llo_original>
// kernel: tpu_custom_call.1
$region0: #{tpu_custom_call.1}
  #allocation0 [shape = 'u32[]', space=smem, size = 0x4, offset = 0x4, fixed_abs, tag = 'smem constant byte address 0x4 - core index']
  #allocation1 [shape = 'u32[144,128]{1,0:T(1,128)}', space=vmem, size = 0x12000, scoped, tag = 'internal scratch']
  #allocation2 [shape = 'bf16[144,256]{1,0:T(16,128)(2,1)}', space=vmem, size = 0x12000, scoped, tag = 'scratch operand']
  %s0 = inlined_call_operand.hbm [shape: f32[2,16,256], index: 0, kind: input, shape index: {}]
  %s1 = inlined_call_operand.hbm [shape: bf16[16,144], index: 1, kind: input, shape index: {}]
  %s2 = inlined_call_operand.hbm [shape: bf16[16,144], index: 2, kind: input, shape index: {}]
  %s3 = inlined_call_operand.hbm [shape: f32[2,16,256], index: 3, kind: output, shape index: {}]
  %s4 = sld [smem:[#allocation0]]
  $region57: #{tpu_custom_call.1} parent=0
    _
  %s6 = ssub.s32 1, %s4
  %s7 = scalar_select 0, %s6, %s4
  $region1: #{tpu_custom_call.1} parent=0
    #allocation3 [shape = 'u8[32768]{0}', space=vmem, size = 0x8000, scoped, tag = 'input window, operand 0']
    #allocation4 [shape = 's32[2]{0}', space=sflag, size = 0x8, scoped, tag = 'scoped memory for tpu_custom_call.1']
    #allocation5 [shape = 's32[2]{0}', space=sflag, size = 0x8, scoped, tag = 'scoped memory for tpu_custom_call.1']
    #allocation6 [shape = 'u8[8192]{0}', space=vmem, size = 0x2000, scoped, tag = 'input window, operand 1, single buffered']
    #allocation7 [shape = 's32[1]{0}', space=sflag, size = 0x4, scoped, tag = 'scoped memory for tpu_custom_call.1']
    #allocation8 [shape = 'u8[8192]{0}', space=vmem, size = 0x2000, scoped, tag = 'input window, operand 2, single buffered']
    #allocation9 [shape = 'u8[32768]{0}', space=vmem, size = 0x8000, scoped, tag = 'output window, operand 0']
    %8 = vsyncpa [#allocation4], 0
    %s9 = scalar_lea.sflag [#allocation4], 1
    %10 = vsyncpa %s9, 0
    %11 = vsyncpa [#allocation7], 0
    %12 = vsyncpa [#allocation5], 0
    %s13 = scalar_lea.sflag [#allocation5], 1
    %14 = vsyncpa %s13, 0
    loop: start=0, step=1, limit=4
    $region2: #{tpu_custom_call.1} parent=1 // loop_pre_header
      _
    $region3: #{tpu_custom_call.1} parent=1 // loop_header
      %s16 = sphi 0, %s20
      %p17 = scmp.ge.s32.totalorder %s16, 4
      %s26 = sphi 0, %s28
      %s29 = sphi 0, %s26
      %s30 = sphi 0, %s29
      %s46 = sphi 0, %s30
      %s50 = sphi 0, %s50
      %s52 = sphi 0, %s50
      %s53 = sphi 0, %s52
      %s67 = sphi 0, %s53
      %s71 = sphi 0, %s71
      %s73 = sphi 0, %s71
      %s74 = sphi 0, %s73
      %s88 = sphi 0, %s74
      %s94 = sphi 0, %s96
      %s97 = sphi 0, %s94
      %s98 = sphi 0, %s97
      %s114 = sphi 0, %s98
    $region4: #{tpu_custom_call.1} parent=1 // loop_header_branch
      %19 = sbr.rel (%p17) target = $region8
    $region5: #{tpu_custom_call.1} parent=1 // loop_body
      %s21 = ssub.s32 %s16, 1
      %s22 = ssub.s32 %s16, 2
      %s23 = sadd.s32 %s16, 1
      %s24 = ssub.s32 %s16, %s23
      %p25 = scmp.eq.s32.totalorder %s24, 0
      %s27 = sadd.s32 %s26, 1
      %s28 = scalar_select %p25, %s26, %s27
      %p31 = pneg %p25
      %p32 = scmp.eq.s32.totalorder %s16, 1
      %p33 = por %p31, %p32
      %p34 = scmp.ne.s32.totalorder %s26, %s29
      %p35 = scmp.eq.s32.totalorder %s16, 0
      %p36 = por %p34, %p35
      %p37 = scmp.ne.s32.totalorder %s26, %s29
      %p38 = scmp.eq.s32.totalorder %s21, 1
      %p39 = por %p37, %p38
      %p40 = scmp.ne.s32.totalorder %s29, %s30
      %p41 = scmp.eq.s32.totalorder %s21, 0
      %p42 = por %p40, %p41
      %p43 = scmp.ne.s32.totalorder %s29, %s30
      %p44 = scmp.eq.s32.totalorder %s22, 1
      %p45 = por %p43, %p44
      %p47 = scmp.ne.s32.totalorder %s30, %s46
      %p48 = scmp.eq.s32.totalorder %s22, 0
      %p49 = por %p47, %p48
      %s51 = sadd.s32 %s50, 1
      %p54 = scmp.eq.s32.totalorder %s16, 1
      %p55 = scmp.ne.s32.totalorder %s50, %s52
      %p56 = scmp.eq.s32.totalorder %s16, 0
      %p57 = por %p55, %p56
      %p58 = scmp.ne.s32.totalorder %s50, %s52
      %p59 = scmp.eq.s32.totalorder %s21, 1
      %p60 = por %p58, %p59
      %p61 = scmp.ne.s32.totalorder %s52, %s53
      %p62 = scmp.eq.s32.totalorder %s21, 0
      %p63 = por %p61, %p62
      %p64 = scmp.ne.s32.totalorder %s52, %s53
      %p65 = scmp.eq.s32.totalorder %s22, 1
      %p66 = por %p64, %p65
      %p68 = scmp.ne.s32.totalorder %s53, %s67
      %p69 = scmp.eq.s32.totalorder %s22, 0
      %p70 = por %p68, %p69
      %s72 = sadd.s32 %s71, 1
      %p75 = scmp.eq.s32.totalorder %s16, 1
      %p76 = scmp.ne.s32.totalorder %s71, %s73
      %p77 = scmp.eq.s32.totalorder %s16, 0
      %p78 = por %p76, %p77
      %p79 = scmp.ne.s32.totalorder %s71, %s73
      %p80 = scmp.eq.s32.totalorder %s21, 1
      %p81 = por %p79, %p80
      %p82 = scmp.ne.s32.totalorder %s73, %s74
      %p83 = scmp.eq.s32.totalorder %s21, 0
      %p84 = por %p82, %p83
      %p85 = scmp.ne.s32.totalorder %s73, %s74
      %p86 = scmp.eq.s32.totalorder %s22, 1
      %p87 = por %p85, %p86
      %p89 = scmp.ne.s32.totalorder %s74, %s88
      %p90 = scmp.eq.s32.totalorder %s22, 0
      %p91 = por %p89, %p90
      %s92 = ssub.s32 %s16, %s23
      %p93 = scmp.eq.s32.totalorder %s92, 0
      %s95 = sadd.s32 %s94, 1
      %s96 = scalar_select %p93, %s94, %s95
      %p99 = pneg %p93
      %p100 = scmp.eq.s32.totalorder %s16, 1
      %p101 = por %p99, %p100
      %p102 = scmp.ne.s32.totalorder %s94, %s97
      %p103 = scmp.eq.s32.totalorder %s16, 0
      %p104 = por %p102, %p103
      %p105 = scmp.ne.s32.totalorder %s94, %s97
      %p106 = scmp.eq.s32.totalorder %s21, 1
      %p107 = por %p105, %p106
      %p108 = scmp.ne.s32.totalorder %s97, %s98
      %p109 = scmp.eq.s32.totalorder %s21, 0
      %p110 = por %p108, %p109
      %p111 = scmp.ne.s32.totalorder %s97, %s98
      %p112 = scmp.eq.s32.totalorder %s22, 1
      %p113 = por %p111, %p112
      %p115 = scmp.ne.s32.totalorder %s98, %s114
      %p116 = scmp.eq.s32.totalorder %s22, 0
      %p117 = por %p115, %p116
      %p118 = scmp.le.s32.totalorder 1, %s16
      %p119 = scmp.lt.s32.totalorder %s16, 3
      %p120 = pnand %p118, %p119
      %p121 = pneg %p120
      // Predicated region
      $region9: #{tpu_custom_call.1} parent=5 // pred_check
        _
      $region10: #{tpu_custom_call.1} parent=5 // pred_check_branch
        %123 = sbr.rel (%p120) target = $region12
      $region11: #{tpu_custom_call.1} parent=5 // pred_region
        %s124 = ssub.s32 %s16, 1
        // Predicated region
        $region13: #{tpu_custom_call.1} parent=11 // pred_check
          %p125 = pneg %p63
        $region14: #{tpu_custom_call.1} parent=11 // pred_check_branch
          %127 = sbr.rel (%p125) target = $region16
        $region15: #{tpu_custom_call.1} parent=11 // pred_region
          %s129 = ssub.s32 256, 256
          %130 = vsyncadd [#allocation7], %s129
          %s131 = sshll.u32 [#allocation6], 4
          %s132 = int_to_ptr.vmem [resolvable:$true] %s131
          %137 = dma.hbm_to_vmem [thread:$0]  %s1, 256, %s132, [#allocation7], 128, 128, 8
        $region16: #{tpu_custom_call.1} parent=11 // pred_fallthru
          _
        // Predicated region
        $region17: #{tpu_custom_call.1} parent=11 // pred_check
          %p138 = pneg %p84
        $region18: #{tpu_custom_call.1} parent=11 // pred_check_branch
          %140 = sbr.rel (%p138) target = $region20
        $region19: #{tpu_custom_call.1} parent=11 // pred_region
          %s142 = ssub.s32 256, 256
          %143 = vsyncadd [#allocation7], %s142
          %s144 = sshll.u32 [#allocation8], 4
          %s145 = int_to_ptr.vmem [resolvable:$true] %s144
          %150 = dma.hbm_to_vmem [thread:$0]  %s2, 256, %s145, [#allocation7], 128, 128, 8
        $region20: #{tpu_custom_call.1} parent=11 // pred_fallthru
          _
      $region12: #{tpu_custom_call.1} parent=5 // pred_fallthru
        _
      %p151 = scmp.lt.s32.totalorder %s16, 2
      // Predicated region
      $region21: #{tpu_custom_call.1} parent=5 // pred_check
        %p152 = pneg %p151
      $region22: #{tpu_custom_call.1} parent=5 // pred_check_branch
        %154 = sbr.rel (%p152) target = $region24
      $region23: #{tpu_custom_call.1} parent=5 // pred_region
        // Predicated region
        $region25: #{tpu_custom_call.1} parent=23 // pred_check
          %p155 = pneg %p36
        $region26: #{tpu_custom_call.1} parent=23 // pred_check_branch
          %157 = sbr.rel (%p155) target = $region28
        $region27: #{tpu_custom_call.1} parent=23 // pred_region
          %s158 = sand.u32 %s26, 1
          %s159 = scalar_lea.sflag [#allocation4], %s158
          %s160 = sand.u32 %s26, 1
          %s161 = smul.addr %s160, 32
          %s162 = scalar_lea.vmem [#allocation3], %s161
          %s164 = ssub.s32 512, 512
          %165 = vsyncadd %s159, %s164
          %s166 = smul.addr %s16, 4
          %s167 = smul.addr %s166, 128
          %s168 = scalar_lea.hbm %s0, %s167
          %s169 = sshll.u32 %s162, 4
          %s170 = int_to_ptr.vmem [resolvable:$true] %s169
          %175 = dma.hbm_to_vmem [thread:$0]  %s168, 512, %s170, %s159, 256, 256, 16
        $region28: #{tpu_custom_call.1} parent=23 // pred_fallthru
          _
      $region24: #{tpu_custom_call.1} parent=5 // pred_fallthru
        _
      %p176 = scmp.le.s32.totalorder 1, %s16
      %p177 = scmp.lt.s32.totalorder %s16, 3
      %p178 = pnand %p176, %p177
      %p179 = pneg %p178
      // Predicated region
      $region29: #{tpu_custom_call.1} parent=5 // pred_check
        _
      $region30: #{tpu_custom_call.1} parent=5 // pred_check_branch
        %181 = sbr.rel (%p178) target = $region32
      $region31: #{tpu_custom_call.1} parent=5 // pred_region
        %s182 = ssub.s32 %s16, 1
        %s183 = sand.u32 %s29, 1
        %s184 = scalar_lea.sflag [#allocation4], %s183
        %s185 = sand.u32 %s29, 1
        %s186 = smul.addr %s185, 32
        %s187 = scalar_lea.vmem [#allocation3], %s186
        // Predicated region
        $region33: #{tpu_custom_call.1} parent=31 // pred_check
          %p188 = pneg %p42
        $region34: #{tpu_custom_call.1} parent=31 // pred_check_branch
          %190 = sbr.rel (%p188) target = $region36
        $region35: #{tpu_custom_call.1} parent=31 // pred_region
          %191 = dma.done %s184, 512
        $region36: #{tpu_custom_call.1} parent=31 // pred_fallthru
          _
        // Predicated region
        $region37: #{tpu_custom_call.1} parent=31 // pred_check
          %p192 = pneg %p63
        $region38: #{tpu_custom_call.1} parent=31 // pred_check_branch
          %194 = sbr.rel (%p192) target = $region40
        $region39: #{tpu_custom_call.1} parent=31 // pred_region
          %195 = dma.done [#allocation7], 256
        $region40: #{tpu_custom_call.1} parent=31 // pred_fallthru
          _
        // Predicated region
        $region41: #{tpu_custom_call.1} parent=31 // pred_check
          %p196 = pneg %p84
        $region42: #{tpu_custom_call.1} parent=31 // pred_check_branch
          %198 = sbr.rel (%p196) target = $region44
        $region43: #{tpu_custom_call.1} parent=31 // pred_region
          %199 = dma.done [#allocation7], 256
        $region44: #{tpu_custom_call.1} parent=31 // pred_fallthru
          _
        %s200 = sand.u32 %s29, 1
        %s201 = scalar_lea.sflag [#allocation4], %s200
        %s202 = sand.u32 %s29, 1
        %s203 = smul.addr %s202, 32
        %s204 = scalar_lea.vmem [#allocation3], %s203
        %p205 = pneg %p42
        %p206 = pneg %p39
        %p207 = pneg %p63
        %p208 = pneg %p60
        %p209 = pneg %p84
        %p210 = pneg %p81
        %p211 = pneg %p110
        %p212 = pneg %p107
        %s213 = sand.u32 %s97, 1
        %s214 = scalar_lea.sflag [#allocation5], %s213
        %s215 = sand.u32 %s97, 1
        %s216 = smul.addr %s215, 32
        %s217 = scalar_lea.vmem [#allocation9], %s216
        %v219 = vld [vmem:[%s187] sm:$0xff]
        %v220 = vld [vmem:[%s187 + $0x8] sm:$0xff]
        %v221 = vld [vmem:[%s187 + $0x10] sm:$0xff]
        %v222 = vld [vmem:[%s187 + $0x18] sm:$0xff]
        %v223 = vlaneseq
        %v224 = vand.u32 %v223, 127
        %v225 = vadd.s32 %v224, 128
        %vm226 = vcmp.lt.s32.totalorder %v224, 0
        %v227 = vsub.s32 0, %v224
        %v228 = vsel %vm226, %v227, %v224
        %v229 = vshrl.u32 %v228, 4
        %v230 = vand.u32 %v228, 15
        %v231 = vsub.s32 0, %v230
        %v232 = vsel %vm226, %v231, %v230
        %vm233 = vcmp.lt.s32.totalorder %v225, 0
        %v234 = vsub.s32 0, %v225
        %v235 = vsel %vm233, %v234, %v225
        %v236 = vshrl.u32 %v235, 4
        %v237 = vand.u32 %v235, 15
        %v238 = vsub.s32 0, %v237
        %v239 = vsel %vm233, %v238, %v237
        %vm240 = vcmp.ne.s32.totalorder %v232, 0
        %vm241 = vcmp.ne.s32.totalorder %v239, 0
        %vm242 = vcmp.lt.s32.totalorder %v232, 0
        %vm243 = vcmp.lt.s32.totalorder %v239, 0
        %vm244 = vmand %vm242, %vm240
        %vm245 = vmand %vm243, %vm241
        %v246 = vadd.s32 %v232, 16
        %v247 = vadd.s32 %v239, 16
        %v248 = vsel %vm244, %v246, %v232
        %v249 = vsel %vm245, %v247, %v239
        %vm250 = vcmp.eq.s32.totalorder %v248, 0
        %vm251 = vcmp.eq.s32.totalorder %v249, 0
        %vm252 = vcmp.eq.s32.totalorder %v248, 15
        %vm253 = vcmp.eq.s32.totalorder %v249, 15
        %vm254 = vcmp.lt.s32.totalorder %v224, 16
        %vm255 = vcmp.lt.s32.totalorder %v225, 16
        %vm256 = vcmp.ge.s32.totalorder %v224, 240
        %vm257 = vcmp.ge.s32.totalorder %v225, 240
        %258 = vrot.lane.b32.xlu0 %v219, 127
        %v259 = vpop.permute.xlu0 %258
        %260 = vrot.lane.b32.xlu0 %v221, 127
        %v261 = vpop.permute.xlu0 %260
        %262 = vrot.lane.b32.xlu0 %v220, 127
        %v263 = vpop.permute.xlu0 %262
        %264 = vrot.lane.b32.xlu0 %v222, 127
        %v265 = vpop.permute.xlu0 %264
        %vm266 = vcmp.lt.s32.totalorder %v224, 127
        %v267 = vsel %vm266, %v259, %v263
        %v268 = vsel %vm266, %v261, %v265
        %v269 = vsel %vm266, %v263, %v259
        %v270 = vsel %vm266, %v265, %v261
        %271 = vrot.lane.b32.xlu0 %v219, 1
        %v272 = vpop.permute.xlu0 %271
        %273 = vrot.lane.b32.xlu0 %v221, 1
        %v274 = vpop.permute.xlu0 %273
        %275 = vrot.lane.b32.xlu0 %v220, 1
        %v276 = vpop.permute.xlu0 %275
        %277 = vrot.lane.b32.xlu0 %v222, 1
        %v278 = vpop.permute.xlu0 %277
        %vm279 = vcmp.lt.s32.totalorder %v224, 1
        %v280 = vsel %vm279, %v272, %v276
        %v281 = vsel %vm279, %v274, %v278
        %v282 = vsel %vm279, %v276, %v272
        %v283 = vsel %vm279, %v278, %v274
        %v284 = vsel %vm250, 1, 0
        %v285 = vsel %vm251, 1, 0
        %vm286 = vcmp.eq.s32.totalorder %v284, 1
        %vm287 = vcmp.eq.s32.totalorder %v285, 1
        %v288 = vsel %vm286, %v267, %v282
        %v289 = vsel %vm287, %v269, %v280
        %v290 = vsel %vm286, %v268, %v283
        %v291 = vsel %vm287, %v270, %v281
        %v292 = vsel %vm252, 1, 0
        %v293 = vsel %vm253, 1, 0
        %vm294 = vcmp.eq.s32.totalorder %v292, 1
        %vm295 = vcmp.eq.s32.totalorder %v293, 1
        %v296 = vsel %vm294, %v282, %v267
        %v297 = vsel %vm295, %v280, %v269
        %v298 = vsel %vm294, %v283, %v268
        %v299 = vsel %vm295, %v281, %v270
        %300 = vrot.lane.b32.xlu0 %v288, 16
        %v301 = vpop.permute.xlu0 %300
        %302 = vrot.lane.b32.xlu0 %v290, 16
        %v303 = vpop.permute.xlu0 %302
        %304 = vrot.lane.b32.xlu0 %v289, 16
        %v305 = vpop.permute.xlu0 %304
        %306 = vrot.lane.b32.xlu0 %v291, 16
        %v307 = vpop.permute.xlu0 %306
        %v308 = vsel %vm254, %v301, %v305
        %v309 = vsel %vm254, %v303, %v307
        %v310 = vsel %vm254, %v305, %v301
        %v311 = vsel %vm254, %v307, %v303
        %312 = vrot.lane.b32.xlu0 %v288, 112
        %v313 = vpop.permute.xlu0 %312
        %314 = vrot.lane.b32.xlu0 %v290, 112
        %v315 = vpop.permute.xlu0 %314
        %316 = vrot.lane.b32.xlu0 %v289, 112
        %v317 = vpop.permute.xlu0 %316
        %318 = vrot.lane.b32.xlu0 %v291, 112
        %v319 = vpop.permute.xlu0 %318
        %vm320 = vcmp.lt.s32.totalorder %v224, 112
        %v321 = vsel %vm320, %v313, %v317
        %v322 = vsel %vm320, %v315, %v319
        %v323 = vsel %vm320, %v317, %v313
        %v324 = vsel %vm320, %v319, %v315
        %v325 = vsel %vm254, 1, 0
        %v326 = vsel %vm255, 1, 0
        %vm327 = vcmp.eq.s32.totalorder %v325, 1
        %vm328 = vcmp.eq.s32.totalorder %v326, 1
        %v329 = vsel %vm327, %v321, %v310
        %v330 = vsel %vm328, %v323, %v308
        %v331 = vsel %vm327, %v322, %v311
        %v332 = vsel %vm328, %v324, %v309
        %v333 = vpack.c.bf16 %v331, %v329
        %v334 = vpack.c.bf16 %v332, %v330
        %335 = vst [vmem:[#allocation2] sm:$0xff] %v333
        %336 = vst [vmem:[#allocation2 + $0x8] sm:$0xff] %v334
        %v337 = vpack.c.bf16 %v290, %v288
        %v338 = vpack.c.bf16 %v291, %v289
        %339 = vst [vmem:[#allocation2 + $0x30] sm:$0xff] %v337
        %340 = vst [vmem:[#allocation2 + $0x38] sm:$0xff] %v338
        %v341 = vsel %vm256, 1, 0
        %v342 = vsel %vm257, 1, 0
        %vm343 = vcmp.eq.s32.totalorder %v341, 1
        %vm344 = vcmp.eq.s32.totalorder %v342, 1
        %v345 = vsel %vm343, %v310, %v321
        %v346 = vsel %vm344, %v308, %v323
        %v347 = vsel %vm343, %v311, %v322
        %v348 = vsel %vm344, %v309, %v324
        %v349 = vpack.c.bf16 %v347, %v345
        %v350 = vpack.c.bf16 %v348, %v346
        %351 = vst [vmem:[#allocation2 + $0x60] sm:$0xff] %v349
        %352 = vst [vmem:[#allocation2 + $0x68] sm:$0xff] %v350
        %353 = vrot.lane.b32.xlu0 %v219, 16
        %v354 = vpop.permute.xlu0 %353
        %355 = vrot.lane.b32.xlu0 %v221, 16
        %v356 = vpop.permute.xlu0 %355
        %357 = vrot.lane.b32.xlu0 %v220, 16
        %v358 = vpop.permute.xlu0 %357
        %359 = vrot.lane.b32.xlu0 %v222, 16
        %v360 = vpop.permute.xlu0 %359
        %v361 = vsel %vm254, %v354, %v358
        %v362 = vsel %vm254, %v356, %v360
        %v363 = vsel %vm254, %v358, %v354
        %v364 = vsel %vm254, %v360, %v356
        %365 = vrot.lane.b32.xlu0 %v219, 112
        %v366 = vpop.permute.xlu0 %365
        %367 = vrot.lane.b32.xlu0 %v221, 112
        %v368 = vpop.permute.xlu0 %367
        %369 = vrot.lane.b32.xlu0 %v220, 112
        %v370 = vpop.permute.xlu0 %369
        %371 = vrot.lane.b32.xlu0 %v222, 112
        %v372 = vpop.permute.xlu0 %371
        %v373 = vsel %vm320, %v366, %v370
        %v374 = vsel %vm320, %v368, %v372
        %v375 = vsel %vm320, %v370, %v366
        %v376 = vsel %vm320, %v372, %v368
        %v377 = vsel %vm327, %v373, %v363
        %v378 = vsel %vm328, %v375, %v361
        %v379 = vsel %vm327, %v374, %v364
        %v380 = vsel %vm328, %v376, %v362
        %v381 = vpack.c.bf16 %v379, %v377
        %v382 = vpack.c.bf16 %v380, %v378
        %383 = vst [vmem:[#allocation2 + $0x10] sm:$0xff] %v381
        %384 = vst [vmem:[#allocation2 + $0x18] sm:$0xff] %v382
        %v385 = vpack.c.bf16 %v221, %v219
        %v386 = vpack.c.bf16 %v222, %v220
        %387 = vst [vmem:[#allocation2 + $0x40] sm:$0xff] %v385
        %388 = vst [vmem:[#allocation2 + $0x48] sm:$0xff] %v386
        %v389 = vsel %vm343, %v363, %v373
        %v390 = vsel %vm344, %v361, %v375
        %v391 = vsel %vm343, %v364, %v374
        %v392 = vsel %vm344, %v362, %v376
        %v393 = vpack.c.bf16 %v391, %v389
        %v394 = vpack.c.bf16 %v392, %v390
        %395 = vst [vmem:[#allocation2 + $0x70] sm:$0xff] %v393
        %396 = vst [vmem:[#allocation2 + $0x78] sm:$0xff] %v394
        %397 = vrot.lane.b32.xlu0 %v296, 16
        %v398 = vpop.permute.xlu0 %397
        %399 = vrot.lane.b32.xlu0 %v298, 16
        %v400 = vpop.permute.xlu0 %399
        %401 = vrot.lane.b32.xlu0 %v297, 16
        %v402 = vpop.permute.xlu0 %401
        %403 = vrot.lane.b32.xlu0 %v299, 16
        %v404 = vpop.permute.xlu0 %403
        %v405 = vsel %vm254, %v398, %v402
        %v406 = vsel %vm254, %v400, %v404
        %v407 = vsel %vm254, %v402, %v398
        %v408 = vsel %vm254, %v404, %v400
        %409 = vrot.lane.b32.xlu0 %v296, 112
        %v410 = vpop.permute.xlu0 %409
        %411 = vrot.lane.b32.xlu0 %v298, 112
        %v412 = vpop.permute.xlu0 %411
        %413 = vrot.lane.b32.xlu0 %v297, 112
        %v414 = vpop.permute.xlu0 %413
        %415 = vrot.lane.b32.xlu0 %v299, 112
        %v416 = vpop.permute.xlu0 %415
        %v417 = vsel %vm320, %v410, %v414
        %v418 = vsel %vm320, %v412, %v416
        %v419 = vsel %vm320, %v414, %v410
        %v420 = vsel %vm320, %v416, %v412
        %v421 = vsel %vm327, %v417, %v407
        %v422 = vsel %vm328, %v419, %v405
        %v423 = vsel %vm327, %v418, %v408
        %v424 = vsel %vm328, %v420, %v406
        %v425 = vpack.c.bf16 %v423, %v421
        %v426 = vpack.c.bf16 %v424, %v422
        %427 = vst [vmem:[#allocation2 + $0x20] sm:$0xff] %v425
        %428 = vst [vmem:[#allocation2 + $0x28] sm:$0xff] %v426
        %v429 = vpack.c.bf16 %v298, %v296
        %v430 = vpack.c.bf16 %v299, %v297
        %431 = vst [vmem:[#allocation2 + $0x50] sm:$0xff] %v429
        %432 = vst [vmem:[#allocation2 + $0x58] sm:$0xff] %v430
        %v433 = vsel %vm343, %v407, %v417
        %v434 = vsel %vm344, %v405, %v419
        %v435 = vsel %vm343, %v408, %v418
        %v436 = vsel %vm344, %v406, %v420
        %v437 = vpack.c.bf16 %v435, %v433
        %v438 = vpack.c.bf16 %v436, %v434
        %439 = vst [vmem:[#allocation2 + $0x80] sm:$0xff] %v437
        %440 = vst [vmem:[#allocation2 + $0x88] sm:$0xff] %v438
        %v441 = vld [vmem:[#allocation6] sm:$0xff]
        %v442 = vld [vmem:[#allocation6 + $0x8] sm:$0xff]
        %v443 = vld [vmem:[#allocation2] sm:$0xff]
        %v444 = vld [vmem:[#allocation2 + $0x8] sm:$0xff]
        %v445 = vld [vmem:[#allocation2 + $0x10] sm:$0xff]
        %v446 = vld [vmem:[#allocation2 + $0x18] sm:$0xff]
        %v447 = vld [vmem:[#allocation2 + $0x20] sm:$0xff]
        %v448 = vld [vmem:[#allocation2 + $0x28] sm:$0xff]
        %v449 = vld [vmem:[#allocation2 + $0x30] sm:$0xff]
        %v450 = vld [vmem:[#allocation2 + $0x38] sm:$0xff]
        %v451 = vld [vmem:[#allocation2 + $0x40] sm:$0xff]
        %v452 = vld [vmem:[#allocation2 + $0x48] sm:$0xff]
        %v453 = vld [vmem:[#allocation2 + $0x50] sm:$0xff]
        %v454 = vld [vmem:[#allocation2 + $0x58] sm:$0xff]
        %v455 = vld [vmem:[#allocation2 + $0x60] sm:$0xff]
        %v456 = vld [vmem:[#allocation2 + $0x68] sm:$0xff]
        %v457 = vld [vmem:[#allocation2 + $0x70] sm:$0xff]
        %v458 = vld [vmem:[#allocation2 + $0x78] sm:$0xff]
        %v459 = vld [vmem:[#allocation2 + $0x80] sm:$0xff]
        %v460 = vld [vmem:[#allocation2 + $0x88] sm:$0xff]
        %v463 = vunpack.c.l.b16 %v441
        %v464 = vunpack.c.h.b16 %v441
        %v465 = vunpack.c.l.b16 %v442
        %v466 = vunpack.c.h.b16 %v442
        %v467 = vpack.c.b16 %v465, %v463
        %v468 = vpack.c.b16 %v466, %v464
        %vm470 = vcmask 130048
        %v472 = vsel %vm470, %v468, 0
        %474 = vmatprep.subr.bf16.mxu0 %v444
        %475 = vmatpush1.bf16.msra.mxu0 %v443
        %476 = vmatprep.subr.bf16.mxu0 %v446
        %477 = vmatpush1.bf16.msra.mxu0 %v445
        %478 = vmatprep.subr.bf16.mxu0 %v448
        %479 = vmatpush1.bf16.msra.mxu0 %v447
        %480 = vmatprep.subr.bf16.mxu0 %v450
        %481 = vmatpush1.bf16.msra.mxu0 %v449
        %482 = vmatprep.subr.bf16.mxu0 %v452
        %483 = vmatpush1.bf16.msra.mxu0 %v451
        %484 = vmatprep.subr.bf16.mxu0 %v454
        %485 = vmatpush1.bf16.msra.mxu0 %v453
        %486 = vmatprep.subr.bf16.mxu0 %v456
        %487 = vmatpush1.bf16.msra.mxu0 %v455
        %488 = vmatprep.subr.bf16.mxu0 %v458
        %489 = vmatpush1.bf16.msra.mxu0 %v457
        %490 = vmatprep.subr.bf16.mxu0 %v460
        %491 = vmatpush1.bf16.msra.mxu0 %v459
        %492 = vmatprep.subr.bf16.mxu0 0
        %493 = vmatpush1.bf16.msra.mxu0 0
        %494 = vmatprep.subr.bf16.mxu0 0
        %495 = vmatpush1.bf16.msra.mxu0 0
        %496 = vmatprep.subr.bf16.mxu0 0
        %497 = vmatpush1.bf16.msra.mxu0 0
        %498 = vmatprep.subr.bf16.mxu0 0
        %499 = vmatpush1.bf16.msra.mxu0 0
        %500 = vmatprep.subr.bf16.mxu0 0
        %501 = vmatpush1.bf16.msra.mxu0 0
        %502 = vmatprep.subr.bf16.mxu0 0
        %503 = vmatpush1.bf16.msra.mxu0 0
        %504 = vmatprep.subr.bf16.mxu0 0
        %505 = vmatpush1.bf16.msra.mxu0 0
        %506 = vmatprep.mubr.bf16.mxu0 %v472
        %507 = vmatmul.mubr.bf16.gmra.mrb[0].mxu0 %v467
        %v508 = vpop.f32.mrb[0].mxu0
        %v509 = vadd.f32 0.0, %v508
        %v510 = vpop.f32.mrb[0].mxu0
        %v511 = vadd.f32 0.0, %v510
        %v512 = vpop.f32.mrb[0].mxu0
        %v513 = vadd.f32 0.0, %v512
        %v514 = vpop.f32.mrb[0].mxu0
        %v515 = vadd.f32 0.0, %v514
        %516 = vdwg.mxu0
        %v517 = vadd.f32 %v509, %v511
        %518 = vadd.xlane.f32.xlu0 %v517
        %v519 = vpop.xlane.xlu0 %518
        %v520 = vadd.f32 %v513, %v515
        %521 = vadd.xlane.f32.xlu0 %v520
        %v522 = vpop.xlane.xlu0 %521
        %v523 = vrcp.pop 256.0
        %v524 = vmul.f32 %v519, %v523
        %v525 = vmul.f32 %v522, %v523
        %v526 = vmul.f32 %v509, %v509
        %v527 = vmul.f32 %v511, %v511
        %v528 = vmul.f32 %v513, %v513
        %v529 = vmul.f32 %v515, %v515
        %v530 = vadd.f32 %v526, %v527
        %531 = vadd.xlane.f32.xlu0 %v530
        %v532 = vpop.xlane.xlu0 %531
        %v533 = vadd.f32 %v528, %v529
        %534 = vadd.xlane.f32.xlu0 %v533
        %v535 = vpop.xlane.xlu0 %534
        %v536 = vmul.f32 %v532, %v523
        %v537 = vmul.f32 %v535, %v523
        %v538 = vmul.f32 %v524, %v524
        %v539 = vmul.f32 %v525, %v525
        %v540 = vsub.f32 %v536, %v538
        %v541 = vsub.f32 %v537, %v539
        %v542 = vsub.f32 %v509, %v524
        %v543 = vsub.f32 %v511, %v524
        %v544 = vsub.f32 %v513, %v525
        %v545 = vsub.f32 %v515, %v525
        %v546 = vadd.f32 %v540, 1e-05
        %v547 = vadd.f32 %v541, 1e-05
        %v548 = vrsqrt.pop %v546
        %v549 = vrsqrt.pop %v547
        %v550 = vmul.f32 %v542, %v548
        %v551 = vmul.f32 %v543, %v548
        %v552 = vmul.f32 %v544, %v549
        %v553 = vmul.f32 %v545, %v549
        %v554 = vmax.f32 %v550, 0.0
        %v555 = vmax.f32 %v551, 0.0
        %v556 = vmax.f32 %v552, 0.0
        %v557 = vmax.f32 %v553, 0.0
        %558 = vrot.lane.b32.xlu0 %v554, 127
        %v559 = vpop.permute.xlu0 %558
        %560 = vrot.lane.b32.xlu0 %v556, 127
        %v561 = vpop.permute.xlu0 %560
        %562 = vrot.lane.b32.xlu0 %v555, 127
        %v563 = vpop.permute.xlu0 %562
        %564 = vrot.lane.b32.xlu0 %v557, 127
        %v565 = vpop.permute.xlu0 %564
        %v566 = vsel %vm266, %v559, %v563
        %v567 = vsel %vm266, %v561, %v565
        %v568 = vsel %vm266, %v563, %v559
        %v569 = vsel %vm266, %v565, %v561
        %570 = vrot.lane.b32.xlu0 %v554, 1
        %v571 = vpop.permute.xlu0 %570
        %572 = vrot.lane.b32.xlu0 %v556, 1
        %v573 = vpop.permute.xlu0 %572
        %574 = vrot.lane.b32.xlu0 %v555, 1
        %v575 = vpop.permute.xlu0 %574
        %576 = vrot.lane.b32.xlu0 %v557, 1
        %v577 = vpop.permute.xlu0 %576
        %v578 = vsel %vm279, %v571, %v575
        %v579 = vsel %vm279, %v573, %v577
        %v580 = vsel %vm279, %v575, %v571
        %v581 = vsel %vm279, %v577, %v573
        %v582 = vsel %vm286, %v566, %v580
        %v583 = vsel %vm287, %v568, %v578
        %v584 = vsel %vm286, %v567, %v581
        %v585 = vsel %vm287, %v569, %v579
        %v586 = vsel %vm294, %v580, %v566
        %v587 = vsel %vm295, %v578, %v568
        %v588 = vsel %vm294, %v581, %v567
        %v589 = vsel %vm295, %v579, %v569
        %590 = vrot.lane.b32.xlu0 %v582, 16
        %v591 = vpop.permute.xlu0 %590
        %592 = vrot.lane.b32.xlu0 %v584, 16
        %v593 = vpop.permute.xlu0 %592
        %594 = vrot.lane.b32.xlu0 %v583, 16
        %v595 = vpop.permute.xlu0 %594
        %596 = vrot.lane.b32.xlu0 %v585, 16
        %v597 = vpop.permute.xlu0 %596
        %v598 = vsel %vm254, %v591, %v595
        %v599 = vsel %vm254, %v593, %v597
        %v600 = vsel %vm254, %v595, %v591
        %v601 = vsel %vm254, %v597, %v593
        %602 = vrot.lane.b32.xlu0 %v582, 112
        %v603 = vpop.permute.xlu0 %602
        %604 = vrot.lane.b32.xlu0 %v584, 112
        %v605 = vpop.permute.xlu0 %604
        %606 = vrot.lane.b32.xlu0 %v583, 112
        %v607 = vpop.permute.xlu0 %606
        %608 = vrot.lane.b32.xlu0 %v585, 112
        %v609 = vpop.permute.xlu0 %608
        %v610 = vsel %vm320, %v603, %v607
        %v611 = vsel %vm320, %v605, %v609
        %v612 = vsel %vm320, %v607, %v603
        %v613 = vsel %vm320, %v609, %v605
        %v614 = vsel %vm327, %v610, %v600
        %v615 = vsel %vm328, %v612, %v598
        %v616 = vsel %vm327, %v611, %v601
        %v617 = vsel %vm328, %v613, %v599
        %v618 = vpack.c.bf16 %v616, %v614
        %v619 = vpack.c.bf16 %v617, %v615
        %620 = vst [vmem:[#allocation2] sm:$0xff] %v618
        %621 = vst [vmem:[#allocation2 + $0x8] sm:$0xff] %v619
        %v622 = vpack.c.bf16 %v584, %v582
        %v623 = vpack.c.bf16 %v585, %v583
        %624 = vst [vmem:[#allocation2 + $0x30] sm:$0xff] %v622
        %625 = vst [vmem:[#allocation2 + $0x38] sm:$0xff] %v623
        %v626 = vsel %vm343, %v600, %v610
        %v627 = vsel %vm344, %v598, %v612
        %v628 = vsel %vm343, %v601, %v611
        %v629 = vsel %vm344, %v599, %v613
        %v630 = vpack.c.bf16 %v628, %v626
        %v631 = vpack.c.bf16 %v629, %v627
        %632 = vst [vmem:[#allocation2 + $0x60] sm:$0xff] %v630
        %633 = vst [vmem:[#allocation2 + $0x68] sm:$0xff] %v631
        %634 = vrot.lane.b32.xlu0 %v554, 16
        %v635 = vpop.permute.xlu0 %634
        %636 = vrot.lane.b32.xlu0 %v556, 16
        %v637 = vpop.permute.xlu0 %636
        %638 = vrot.lane.b32.xlu0 %v555, 16
        %v639 = vpop.permute.xlu0 %638
        %640 = vrot.lane.b32.xlu0 %v557, 16
        %v641 = vpop.permute.xlu0 %640
        %v642 = vsel %vm254, %v635, %v639
        %v643 = vsel %vm254, %v637, %v641
        %v644 = vsel %vm254, %v639, %v635
        %v645 = vsel %vm254, %v641, %v637
        %646 = vrot.lane.b32.xlu0 %v554, 112
        %v647 = vpop.permute.xlu0 %646
        %648 = vrot.lane.b32.xlu0 %v556, 112
        %v649 = vpop.permute.xlu0 %648
        %650 = vrot.lane.b32.xlu0 %v555, 112
        %v651 = vpop.permute.xlu0 %650
        %652 = vrot.lane.b32.xlu0 %v557, 112
        %v653 = vpop.permute.xlu0 %652
        %v654 = vsel %vm320, %v647, %v651
        %v655 = vsel %vm320, %v649, %v653
        %v656 = vsel %vm320, %v651, %v647
        %v657 = vsel %vm320, %v653, %v649
        %v658 = vsel %vm327, %v654, %v644
        %v659 = vsel %vm328, %v656, %v642
        %v660 = vsel %vm327, %v655, %v645
        %v661 = vsel %vm328, %v657, %v643
        %v662 = vpack.c.bf16 %v660, %v658
        %v663 = vpack.c.bf16 %v661, %v659
        %664 = vst [vmem:[#allocation2 + $0x10] sm:$0xff] %v662
        %665 = vst [vmem:[#allocation2 + $0x18] sm:$0xff] %v663
        %v666 = vpack.c.bf16 %v556, %v554
        %v667 = vpack.c.bf16 %v557, %v555
        %668 = vst [vmem:[#allocation2 + $0x40] sm:$0xff] %v666
        %669 = vst [vmem:[#allocation2 + $0x48] sm:$0xff] %v667
        %v670 = vsel %vm343, %v644, %v654
        %v671 = vsel %vm344, %v642, %v656
        %v672 = vsel %vm343, %v645, %v655
        %v673 = vsel %vm344, %v643, %v657
        %v674 = vpack.c.bf16 %v672, %v670
        %v675 = vpack.c.bf16 %v673, %v671
        %676 = vst [vmem:[#allocation2 + $0x70] sm:$0xff] %v674
        %677 = vst [vmem:[#allocation2 + $0x78] sm:$0xff] %v675
        %678 = vrot.lane.b32.xlu0 %v586, 16
        %v679 = vpop.permute.xlu0 %678
        %680 = vrot.lane.b32.xlu0 %v588, 16
        %v681 = vpop.permute.xlu0 %680
        %682 = vrot.lane.b32.xlu0 %v587, 16
        %v683 = vpop.permute.xlu0 %682
        %684 = vrot.lane.b32.xlu0 %v589, 16
        %v685 = vpop.permute.xlu0 %684
        %v686 = vsel %vm254, %v679, %v683
        %v687 = vsel %vm254, %v681, %v685
        %v688 = vsel %vm254, %v683, %v679
        %v689 = vsel %vm254, %v685, %v681
        %690 = vrot.lane.b32.xlu0 %v586, 112
        %v691 = vpop.permute.xlu0 %690
        %692 = vrot.lane.b32.xlu0 %v588, 112
        %v693 = vpop.permute.xlu0 %692
        %694 = vrot.lane.b32.xlu0 %v587, 112
        %v695 = vpop.permute.xlu0 %694
        %696 = vrot.lane.b32.xlu0 %v589, 112
        %v697 = vpop.permute.xlu0 %696
        %v698 = vsel %vm320, %v691, %v695
        %v699 = vsel %vm320, %v693, %v697
        %v700 = vsel %vm320, %v695, %v691
        %v701 = vsel %vm320, %v697, %v693
        %v702 = vsel %vm327, %v698, %v688
        %v703 = vsel %vm328, %v700, %v686
        %v704 = vsel %vm327, %v699, %v689
        %v705 = vsel %vm328, %v701, %v687
        %v706 = vpack.c.bf16 %v704, %v702
        %v707 = vpack.c.bf16 %v705, %v703
        %708 = vst [vmem:[#allocation2 + $0x20] sm:$0xff] %v706
        %709 = vst [vmem:[#allocation2 + $0x28] sm:$0xff] %v707
        %v710 = vpack.c.bf16 %v588, %v586
        %v711 = vpack.c.bf16 %v589, %v587
        %712 = vst [vmem:[#allocation2 + $0x50] sm:$0xff] %v710
        %713 = vst [vmem:[#allocation2 + $0x58] sm:$0xff] %v711
        %v714 = vsel %vm343, %v688, %v698
        %v715 = vsel %vm344, %v686, %v700
        %v716 = vsel %vm343, %v689, %v699
        %v717 = vsel %vm344, %v687, %v701
        %v718 = vpack.c.bf16 %v716, %v714
        %v719 = vpack.c.bf16 %v717, %v715
        %720 = vst [vmem:[#allocation2 + $0x80] sm:$0xff] %v718
        %721 = vst [vmem:[#allocation2 + $0x88] sm:$0xff] %v719
        %v722 = vld [vmem:[#allocation8] sm:$0xff]
        %v723 = vld [vmem:[#allocation8 + $0x8] sm:$0xff]
        %v724 = vld [vmem:[#allocation2] sm:$0xff]
        %v725 = vld [vmem:[#allocation2 + $0x8] sm:$0xff]
        %v726 = vld [vmem:[#allocation2 + $0x10] sm:$0xff]
        %v727 = vld [vmem:[#allocation2 + $0x18] sm:$0xff]
        %v728 = vld [vmem:[#allocation2 + $0x20] sm:$0xff]
        %v729 = vld [vmem:[#allocation2 + $0x28] sm:$0xff]
        %v730 = vld [vmem:[#allocation2 + $0x30] sm:$0xff]
        %v731 = vld [vmem:[#allocation2 + $0x38] sm:$0xff]
        %v732 = vld [vmem:[#allocation2 + $0x40] sm:$0xff]
        %v733 = vld [vmem:[#allocation2 + $0x48] sm:$0xff]
        %v734 = vld [vmem:[#allocation2 + $0x50] sm:$0xff]
        %v735 = vld [vmem:[#allocation2 + $0x58] sm:$0xff]
        %v736 = vld [vmem:[#allocation2 + $0x60] sm:$0xff]
        %v737 = vld [vmem:[#allocation2 + $0x68] sm:$0xff]
        %v738 = vld [vmem:[#allocation2 + $0x70] sm:$0xff]
        %v739 = vld [vmem:[#allocation2 + $0x78] sm:$0xff]
        %v740 = vld [vmem:[#allocation2 + $0x80] sm:$0xff]
        %v741 = vld [vmem:[#allocation2 + $0x88] sm:$0xff]
        %v744 = vunpack.c.l.b16 %v722
        %v745 = vunpack.c.h.b16 %v722
        %v746 = vunpack.c.l.b16 %v723
        %v747 = vunpack.c.h.b16 %v723
        %v748 = vpack.c.b16 %v746, %v744
        %v749 = vpack.c.b16 %v747, %v745
        %v752 = vsel %vm470, %v749, 0
        %754 = vmatprep.subr.bf16.mxu0 %v725
        %755 = vmatpush1.bf16.msra.mxu0 %v724
        %756 = vmatprep.subr.bf16.mxu0 %v727
        %757 = vmatpush1.bf16.msra.mxu0 %v726
        %758 = vmatprep.subr.bf16.mxu0 %v729
        %759 = vmatpush1.bf16.msra.mxu0 %v728
        %760 = vmatprep.subr.bf16.mxu0 %v731
        %761 = vmatpush1.bf16.msra.mxu0 %v730
        %762 = vmatprep.subr.bf16.mxu0 %v733
        %763 = vmatpush1.bf16.msra.mxu0 %v732
        %764 = vmatprep.subr.bf16.mxu0 %v735
        %765 = vmatpush1.bf16.msra.mxu0 %v734
        %766 = vmatprep.subr.bf16.mxu0 %v737
        %767 = vmatpush1.bf16.msra.mxu0 %v736
        %768 = vmatprep.subr.bf16.mxu0 %v739
        %769 = vmatpush1.bf16.msra.mxu0 %v738
        %770 = vmatprep.subr.bf16.mxu0 %v741
        %771 = vmatpush1.bf16.msra.mxu0 %v740
        %772 = vmatprep.subr.bf16.mxu0 0
        %773 = vmatpush1.bf16.msra.mxu0 0
        %774 = vmatprep.subr.bf16.mxu0 0
        %775 = vmatpush1.bf16.msra.mxu0 0
        %776 = vmatprep.subr.bf16.mxu0 0
        %777 = vmatpush1.bf16.msra.mxu0 0
        %778 = vmatprep.subr.bf16.mxu0 0
        %779 = vmatpush1.bf16.msra.mxu0 0
        %780 = vmatprep.subr.bf16.mxu0 0
        %781 = vmatpush1.bf16.msra.mxu0 0
        %782 = vmatprep.subr.bf16.mxu0 0
        %783 = vmatpush1.bf16.msra.mxu0 0
        %784 = vmatprep.subr.bf16.mxu0 0
        %785 = vmatpush1.bf16.msra.mxu0 0
        %786 = vmatprep.mubr.bf16.mxu0 %v752
        %787 = vmatmul.mubr.bf16.gmra.mrb[0].mxu0 %v748
        %v788 = vpop.f32.mrb[0].mxu0
        %v789 = vadd.f32 0.0, %v788
        %v790 = vpop.f32.mrb[0].mxu0
        %v791 = vadd.f32 0.0, %v790
        %v792 = vpop.f32.mrb[0].mxu0
        %v793 = vadd.f32 0.0, %v792
        %v794 = vpop.f32.mrb[0].mxu0
        %v795 = vadd.f32 0.0, %v794
        %796 = vdwg.mxu0
        %v797 = vadd.f32 %v789, %v791
        %798 = vadd.xlane.f32.xlu0 %v797
        %v799 = vpop.xlane.xlu0 %798
        %v800 = vadd.f32 %v793, %v795
        %801 = vadd.xlane.f32.xlu0 %v800
        %v802 = vpop.xlane.xlu0 %801
        %v803 = vmul.f32 %v799, %v523
        %v804 = vmul.f32 %v802, %v523
        %v805 = vmul.f32 %v789, %v789
        %v806 = vmul.f32 %v791, %v791
        %v807 = vmul.f32 %v793, %v793
        %v808 = vmul.f32 %v795, %v795
        %v809 = vadd.f32 %v805, %v806
        %810 = vadd.xlane.f32.xlu0 %v809
        %v811 = vpop.xlane.xlu0 %810
        %v812 = vadd.f32 %v807, %v808
        %813 = vadd.xlane.f32.xlu0 %v812
        %v814 = vpop.xlane.xlu0 %813
        %v815 = vmul.f32 %v811, %v523
        %v816 = vmul.f32 %v814, %v523
        %v817 = vmul.f32 %v803, %v803
        %v818 = vmul.f32 %v804, %v804
        %v819 = vsub.f32 %v815, %v817
        %v820 = vsub.f32 %v816, %v818
        %v821 = vsub.f32 %v789, %v803
        %v822 = vsub.f32 %v791, %v803
        %v823 = vsub.f32 %v793, %v804
        %v824 = vsub.f32 %v795, %v804
        %v825 = vadd.f32 %v819, 1e-05
        %v826 = vadd.f32 %v820, 1e-05
        %v827 = vrsqrt.pop %v825
        %v828 = vrsqrt.pop %v826
        %v829 = vmul.f32 %v821, %v827
        %v830 = vmul.f32 %v822, %v827
        %v831 = vmul.f32 %v823, %v828
        %v832 = vmul.f32 %v824, %v828
        %v833 = vadd.f32 %v219, %v829
        %v834 = vadd.f32 %v220, %v830
        %v835 = vadd.f32 %v221, %v831
        %v836 = vadd.f32 %v222, %v832
        %837 = vst [vmem:[%s217] sm:$0xff] %v833
        %838 = vst [vmem:[%s217 + $0x8] sm:$0xff] %v834
        %839 = vst [vmem:[%s217 + $0x10] sm:$0xff] %v835
        %840 = vst [vmem:[%s217 + $0x18] sm:$0xff] %v836
        %s841 = sand.u32 %s97, 1
        %s842 = scalar_lea.sflag [#allocation5], %s841
        %s843 = sand.u32 %s97, 1
        %s844 = smul.addr %s843, 32
        %s845 = scalar_lea.vmem [#allocation9], %s844
        // Predicated region
        $region45: #{tpu_custom_call.1} parent=31 // pred_check
          %p846 = pneg %p107
        $region46: #{tpu_custom_call.1} parent=31 // pred_check_branch
          %848 = sbr.rel (%p846) target = $region48
        $region47: #{tpu_custom_call.1} parent=31 // pred_region
          %s850 = ssub.s32 512, 512
          %851 = vsyncadd %s842, %s850
          %s852 = smul.addr %s21, 4
          %s853 = smul.addr %s852, 128
          %s854 = scalar_lea.hbm %s3, %s853
          %s855 = sshll.u32 %s845, 4
          %s856 = int_to_ptr.vmem [resolvable:$true] %s855
          %861 = dma.vmem_to_hbm [thread:$0]  %s856, 512, %s854, %s842, 256, 256, 16
        $region48: #{tpu_custom_call.1} parent=31 // pred_fallthru
          _
      $region32: #{tpu_custom_call.1} parent=5 // pred_fallthru
        _
      %p862 = scmp.le.s32.totalorder 2, %s16
      // Predicated region
      $region49: #{tpu_custom_call.1} parent=5 // pred_check
        %p863 = pneg %p862
      $region50: #{tpu_custom_call.1} parent=5 // pred_check_branch
        %865 = sbr.rel (%p863) target = $region52
      $region51: #{tpu_custom_call.1} parent=5 // pred_region
        %s866 = ssub.s32 %s16, 2
        // Predicated region
        $region53: #{tpu_custom_call.1} parent=51 // pred_check
          %p867 = pneg %p113
        $region54: #{tpu_custom_call.1} parent=51 // pred_check_branch
          %869 = sbr.rel (%p867) target = $region56
        $region55: #{tpu_custom_call.1} parent=51 // pred_region
          %s870 = sand.u32 %s98, 1
          %s871 = scalar_lea.sflag [#allocation5], %s870
          %s872 = sand.u32 %s98, 1
          %s873 = smul.addr %s872, 32
          %s874 = scalar_lea.vmem [#allocation9], %s873
          %875 = dma.done %s871, 512
        $region56: #{tpu_custom_call.1} parent=51 // pred_fallthru
          _
      $region52: #{tpu_custom_call.1} parent=5 // pred_fallthru
        _
    $region6: #{tpu_custom_call.1} parent=1 // loop_footer
      %s20 = sadd.s32 1, %s16
    $region7: #{tpu_custom_call.1} parent=1 // loop_footer_branch
      %15 = sbr.rel target = $region3
    $region8: #{tpu_custom_call.1} parent=1 // loop_exit
      _
    %876 = vsyncpa [#allocation4], 1
    %s877 = scalar_lea.sflag [#allocation4], 1
    %878 = vsyncpa %s877, 1
    %879 = vsyncpa [#allocation7], 1
    %880 = vsyncpa [#allocation5], 1
    %s881 = scalar_lea.sflag [#allocation5], 1
    %882 = vsyncpa %s881, 1

</llo_original>
